<compile_context>
chip_gen: v6e
topology: v6e:2x2x1
jax: 0.10.0
libtpu: 0.0.40
codegen_flags: <defaults>
</compile_context>

<pallas_src>
import jax
import jax.numpy as jnp
from jax.experimental import pallas as pl
from jax.experimental.pallas import tpu as pltpu

_LANE = 128
_MAX_TILE = 8192                            # tokens per grid step, upper cap
_VMEM_WORKING_BUDGET = 12 * 1024 * 1024     # bytes for the token-dependent working set
_VMEM_LIMIT_BYTES = 32 * 1024 * 1024        # scoped-VMEM limit handed to Mosaic


def _round_down(x, m):
    return (x // m) * m


def _pick_token_tile(n_tokens, C, Hd, B, in_itemsize, gran):
    """Largest token tile that fits the VMEM budget; guarantees >=2 grid steps (v7x)."""
    per_tok = (2 * C * in_itemsize          # double-buffered input block
               + 3 * C * 4                  # f32 LN temporaries (x, centered, normalized)
               + 3 * Hd * 4                 # hidden activations (+ bf16 copy)
               + 2 * 4)                     # double-buffered score output
    tile = int(_VMEM_WORKING_BUDGET // max(per_tok, 1))
    tile = min(tile, _MAX_TILE)
    if n_tokens <= gran:
        return n_tokens                     # single full-extent block
    tile = max(gran, _round_down(tile, gran))
    tile = min(tile, _round_down(n_tokens, gran))
    # v7x has 2 TensorCores and shards 'parallel' grid axes across them; make
    # sure there are at least two grid steps to shard.
    if B * pl.cdiv(n_tokens, tile) < 2:
        tile = max(gran, _round_down(pl.cdiv(n_tokens, 2), gran))
    return tile


# --------------------------------------------------------------------------- #
# Kernel A: channels on sublanes, tokens on lanes (4-D / channels-first path). #
# --------------------------------------------------------------------------- #
def _score_net_kernel_cxt(x_ref, gamma_ref, beta_ref, w1_ref, b1_ref, w2_ref, b2_ref,
                          o_ref):
    # x_ref: (C, TILE).  Math in f32; LayerNorm reduce runs cross-sublane (XLU).
    x = x_ref[...].astype(jnp.float32)

    # LayerNorm over channels (axis 0). PyTorch semantics: biased var, eps=1e-5.
    mean = jnp.mean(x, axis=0, keepdims=True)                     # (1, T)
    cent = x - mean
    var = jnp.mean(cent * cent, axis=0, keepdims=True)            # (1, T)
    xn = cent * jax.lax.rsqrt(var + 1e-5)
    xn = xn * gamma_ref[...] + beta_ref[...]                      # (C,1) lane-broadcast

    # Linear(C, Hd): bf16 MXU inputs, f32 accumulation.  W1 stays in PyTorch (Hd, C) layout.
    h = jnp.dot(w1_ref[...], xn.astype(jnp.bfloat16),
                preferred_element_type=jnp.float32) + b1_ref[...]  # (Hd, T)
    # tanh-GELU: single EUP tanh instead of a long erf polynomial on the VPU.
    h = jax.nn.gelu(h, approximate=True)

    # Linear(Hd, 1) + Sigmoid: VPU multiply + sublane reduce (no degenerate MXU pass).
    s = jnp.sum(h * w2_ref[...], axis=0, keepdims=True) + b2_ref[...]   # (1, T)
    o_ref[...] = jax.nn.sigmoid(s).astype(o_ref.dtype)


def _run_score_net_cxt(x, p):
    """x: (B, C, T) channels-first tokens -> scores (B, 1, T)."""
    B, C, T = x.shape
    w1 = p["w1"].astype(jnp.bfloat16)                 # (Hd, C) -- tiny, cast once
    Hd = w1.shape[0]
    gamma = p["gamma"].reshape(C, 1).astype(jnp.float32)
    beta = p["beta"].reshape(C, 1).astype(jnp.float32)
    b1 = p["b1"].reshape(Hd, 1).astype(jnp.float32)
    w2 = p["w2"].reshape(Hd, 1).astype(jnp.float32)   # (1,Hd) row -> (Hd,1) column
    b2 = p["b2"].reshape(1, 1).astype(jnp.float32)

    tile = _pick_token_tile(T, C, Hd, B, x.dtype.itemsize, _LANE)
    grid = (B, pl.cdiv(T, tile))                      # ragged edge block: no jnp.pad

    cost = pl.CostEstimate(
        flops=int(B * T * (2 * C * Hd + 10 * C + 12 * Hd)),
        transcendentals=int(B * T * (Hd + 2)),
        bytes_accessed=int(B * C * T * x.dtype.itemsize + B * T * 4
                           + w1.size * 2 + (2 * C + 2 * Hd + 1) * 4),
    )

    return pl.pallas_call(
        _score_net_kernel_cxt,
        out_shape=jax.ShapeDtypeStruct((B, 1, T), jnp.float32),
        grid_spec=pltpu.PrefetchScalarGridSpec(
            num_scalar_prefetch=0,
            grid=grid,
            in_specs=[
                pl.BlockSpec((None, C, tile), lambda b, t: (b, 0, t)),  # tokens (C, tile)
                pl.BlockSpec((C, 1), lambda b, t: (0, 0)),              # ln gamma
                pl.BlockSpec((C, 1), lambda b, t: (0, 0)),              # ln beta
                pl.BlockSpec((Hd, C), lambda b, t: (0, 0)),             # W1 (bf16)
                pl.BlockSpec((Hd, 1), lambda b, t: (0, 0)),             # b1
                pl.BlockSpec((Hd, 1), lambda b, t: (0, 0)),             # w2 column
                pl.BlockSpec((1, 1), lambda b, t: (0, 0)),              # b2
            ],
            out_specs=pl.BlockSpec((None, 1, tile), lambda b, t: (b, 0, t)),  # lane-dense
        ),
        compiler_params=pltpu.CompilerParams(
            dimension_semantics=("parallel", "parallel"),
            vmem_limit_bytes=_VMEM_LIMIT_BYTES),
        cost_estimate=cost,
    )(x, gamma, beta, w1, b1, w2, b2)


# ---------------------------------------------------------------------------- #
# Kernel B: tokens on sublanes, channels on lanes (3-D [B, N, C] path).         #
# Avoids the old wrapper transpose (a full HBM round trip of the feature map).  #
# ---------------------------------------------------------------------------- #
def _score_net_kernel_nlc(x_ref, gamma_ref, beta_ref, w1t_ref, b1_ref, w2_ref, b2_ref,
                          o_ref):
    # x_ref: (TILE_N, C).  LayerNorm reduce runs cross-lane (XLU).
    x = x_ref[...].astype(jnp.float32)

    mean = jnp.mean(x, axis=1, keepdims=True)                     # (T, 1)
    cent = x - mean
    var = jnp.mean(cent * cent, axis=1, keepdims=True)
    xn = cent * jax.lax.rsqrt(var + 1e-5)
    xn = xn * gamma_ref[...] + beta_ref[...]                      # (1, C) sublane-broadcast

    h = jnp.dot(xn.astype(jnp.bfloat16), w1t_ref[...],
                preferred_element_type=jnp.float32) + b1_ref[...]  # (T, Hd)
    h = jax.nn.gelu(h, approximate=True)

    s = jnp.sum(h * w2_ref[...], axis=1, keepdims=True) + b2_ref[...]   # (T, 1)
    o_ref[...] = jax.nn.sigmoid(s).astype(o_ref.dtype)


def _run_score_net_nlc(x, p):
    """x: (B, N, C) tokens-first -> scores (B, N, 1)."""
    B, N, C = x.shape
    w1t = p["w1"].T.astype(jnp.bfloat16)              # (C, Hd) -- tiny, cast once
    Hd = w1t.shape[1]
    gamma = p["gamma"].reshape(1, C).astype(jnp.float32)
    beta = p["beta"].reshape(1, C).astype(jnp.float32)
    b1 = p["b1"].reshape(1, Hd).astype(jnp.float32)
    w2 = p["w2"].reshape(1, Hd).astype(jnp.float32)
    b2 = p["b2"].reshape(1, 1).astype(jnp.float32)

    tile = _pick_token_tile(N, C, Hd, B, x.dtype.itemsize, 8)     # sublane granularity
    grid = (B, pl.cdiv(N, tile))                      # ragged edge block: no jnp.pad

    cost = pl.CostEstimate(
        flops=int(B * N * (2 * C * Hd + 10 * C + 12 * Hd)),
        transcendentals=int(B * N * (Hd + 2)),
        bytes_accessed=int(B * N * C * x.dtype.itemsize + B * N * 4
                           + w1t.size * 2 + (2 * C + 2 * Hd + 1) * 4),
    )

    return pl.pallas_call(
        _score_net_kernel_nlc,
        out_shape=jax.ShapeDtypeStruct((B, N, 1), jnp.float32),
        grid_spec=pltpu.PrefetchScalarGridSpec(
            num_scalar_prefetch=0,
            grid=grid,
            in_specs=[
                pl.BlockSpec((None, tile, C), lambda b, t: (b, t, 0)),  # tokens (tile, C)
                pl.BlockSpec((1, C), lambda b, t: (0, 0)),              # ln gamma
                pl.BlockSpec((1, C), lambda b, t: (0, 0)),              # ln beta
                pl.BlockSpec((C, Hd), lambda b, t: (0, 0)),             # W1^T (bf16)
                pl.BlockSpec((1, Hd), lambda b, t: (0, 0)),             # b1
                pl.BlockSpec((1, Hd), lambda b, t: (0, 0)),             # w2 row
                pl.BlockSpec((1, 1), lambda b, t: (0, 0)),              # b2
            ],
            out_specs=pl.BlockSpec((None, tile, 1), lambda b, t: (b, t, 0)),
        ),
        compiler_params=pltpu.CompilerParams(
            dimension_semantics=("parallel", "parallel"),
            vmem_limit_bytes=_VMEM_LIMIT_BYTES),
        cost_estimate=cost,
    )(x, gamma, beta, w1t, b1, w2, b2)


# --------------------------------------------------------------------------- #
# Module-level forward.                                                         #
# --------------------------------------------------------------------------- #
def predictor_lg_forward(feats, params):
    """JAX/Pallas equivalent of PredictorLG.forward.

    feats:  list of [B, C, H, W] (or [B, N, C]) arrays (f32 or bf16).
    params: list of per-modal dicts with keys gamma(C,), beta(C,),
            w1(Hd,C), b1(Hd,), w2(1,Hd), b2(1,)  -- native PyTorch layouts.
    Returns list of [B, 1, H, W] (resp. [B, 1, N]) soft-selection score maps.
    """
    outs = []
    for feat, p in zip(feats, params):
        if feat.ndim == 4:
            B, C, H, W = feat.shape
            x = feat.reshape(B, C, H * W)               # metadata-only reshape
            scores = _run_score_net_cxt(x, p)           # (B, 1, H*W)
            outs.append(scores.reshape(B, 1, H, W))     # matches .view(B, 1, H, W)
        else:
            scores = _run_score_net_nlc(feat, p)        # (B, N, 1)
            outs.append(jnp.transpose(scores, (0, 2, 1)))  # size-1 dim: free transpose
    return outs


def _init_params(key, embed_dim, num_modals):
    hid = embed_dim // 4
    params = []
    for _ in range(num_modals):
        k1, k2, k3, k4, key = jax.random.split(key, 5)
        params.append(dict(
            gamma=jnp.ones((embed_dim,), jnp.float32),
            beta=jnp.zeros((embed_dim,), jnp.float32),
            w1=jax.random.normal(k1, (hid, embed_dim), jnp.float32) * 0.05,
            b1=jax.random.normal(k2, (hid,), jnp.float32) * 0.05,
            w2=jax.random.normal(k3, (1, hid), jnp.float32) * 0.05,
            b2=jax.random.normal(k4, (1,), jnp.float32) * 0.05,
        ))
    return params


def _reference_forward(feats, params):
    """Pure-JAX reference mirroring the PyTorch module (exact-erf GELU, f32)."""
    outs = []
    for feat, p in zip(feats, params):
        if feat.ndim == 4:
            B, C, H, W = feat.shape
            t = jnp.transpose(feat, (0, 2, 3, 1)).reshape(B, -1, C)
        else:
            t = feat
        mean = jnp.mean(t, axis=-1, keepdims=True)
        var = jnp.mean((t - mean) ** 2, axis=-1, keepdims=True)
        xn = (t - mean) / jnp.sqrt(var + 1e-5) * p["gamma"] + p["beta"]
        h = jax.nn.gelu(xn @ p["w1"].T + p["b1"], approximate=False)
        s = jax.nn.sigmoid(h @ p["w2"].T + p["b2"])
        if feat.ndim == 4:
            outs.append(s.reshape(B, 1, H, W))
        else:
            outs.append(jnp.transpose(s, (0, 2, 1)))
    return outs


if __name__ == "__main__":
    key = jax.random.PRNGKey(0)
    kf0, kf1, kf2, kp = jax.random.split(key, 4)

    B, C = 2, 32                                 # embed_dim = 32 -> hidden = 8
    feats = [
        jax.random.normal(kf0, (B, C, 16, 16), jnp.float32),  # 4-D, lane-aligned (256 tokens)
        jax.random.normal(kf1, (B, C, 15, 15), jnp.float32),  # 4-D, ragged edge block (225 tokens)
        jax.random.normal(kf2, (B, 203, C), jnp.float32),     # 3-D branch, ragged sublane edge
    ]
    params = _init_params(kp, C, len(feats))

    outs = predictor_lg_forward(feats, params)
    outs = [jax.block_until_ready(o) for o in outs]

    refs = _reference_forward(feats, params)
    expected_shapes = [(B, 1, 16, 16), (B, 1, 15, 15), (B, 1, 203)]
    for o, r, s in zip(outs, refs, expected_shapes):
        assert o.shape == s, (o.shape, s)
        # bf16 MXU inputs + tanh-GELU vs PyTorch's exact-erf f32 path gives ~1e-3
        # absolute drift on the (0, 1) sigmoid score; tolerance documents this.
        assert jnp.allclose(o, r, atol=5e-3, rtol=1e-3), float(jnp.max(jnp.abs(o - r)))

    print("KERNEL_OK")
</pallas_src>

<mosaic_0001>
module attributes {stable_mosaic.version = 11 : i64} {
  func.func @_score_net_kernel_cxt(%arg0: i32, %arg1: i32, %arg2: memref<1x32x256xf32, #tpu.memory_space<vmem>>, %arg3: memref<32x1xf32, #tpu.memory_space<vmem>>, %arg4: memref<32x1xf32, #tpu.memory_space<vmem>>, %arg5: memref<8x32xbf16, #tpu.memory_space<vmem>>, %arg6: memref<8x1xf32, #tpu.memory_space<vmem>>, %arg7: memref<8x1xf32, #tpu.memory_space<vmem>>, %arg8: memref<1x1xf32, #tpu.memory_space<vmem>>, %arg9: memref<1x1x256xf32, #tpu.memory_space<vmem>>) attributes {dimension_semantics = [#tpu.dimension_semantics<parallel>, #tpu.dimension_semantics<parallel>], iteration_bounds = array<i64: 2, 1>, scalar_prefetch = 0 : i64, scratch_operands = 0 : i64, tpu.core_type = #tpu.core_type<tc>, window_params = [{transform_indices = @transform_0, window_bounds = array<i64: 1, 32, 256>}, {pipeline_mode = #tpu.pipeline_mode<synchronous>, transform_indices = @transform_1, window_bounds = array<i64: 32, 1>}, {pipeline_mode = #tpu.pipeline_mode<synchronous>, transform_indices = @transform_2, window_bounds = array<i64: 32, 1>}, {pipeline_mode = #tpu.pipeline_mode<synchronous>, transform_indices = @transform_3, window_bounds = array<i64: 8, 32>}, {pipeline_mode = #tpu.pipeline_mode<synchronous>, transform_indices = @transform_4, window_bounds = array<i64: 8, 1>}, {pipeline_mode = #tpu.pipeline_mode<synchronous>, transform_indices = @transform_5, window_bounds = array<i64: 8, 1>}, {pipeline_mode = #tpu.pipeline_mode<synchronous>, transform_indices = @transform_6, window_bounds = array<i64: 1, 1>}, {transform_indices = @transform_7, window_bounds = array<i64: 1, 1, 256>}]} {
    %c0 = arith.constant 0 : index
    %c0_0 = arith.constant 0 : index
    %c0_1 = arith.constant 0 : index
    %0 = vector.load %arg2[%c0, %c0_0, %c0_1] : memref<1x32x256xf32, #tpu.memory_space<vmem>>, vector<1x32x256xf32>
    %1 = vector.shape_cast %0 : vector<1x32x256xf32> to vector<32x256xf32>
    %cst = arith.constant dense<0.000000e+00> : vector<256xf32>
    %2 = vector.multi_reduction <add>, %1, %cst [0] : vector<32x256xf32> to vector<256xf32>
    %3 = vector.shape_cast %2 : vector<256xf32> to vector<1x256xf32>
    %cst_2 = arith.constant 3.200000e+01 : f32
    %4 = vector.broadcast %cst_2 : f32 to vector<1x256xf32>
    %5 = arith.divf %3, %4 : vector<1x256xf32>
    %6 = vector.broadcast %5 : vector<1x256xf32> to vector<32x256xf32>
    %7 = arith.subf %1, %6 : vector<32x256xf32>
    %8 = arith.mulf %7, %7 : vector<32x256xf32>
    %cst_3 = arith.constant dense<0.000000e+00> : vector<256xf32>
    %9 = vector.multi_reduction <add>, %8, %cst_3 [0] : vector<32x256xf32> to vector<256xf32>
    %10 = vector.shape_cast %9 : vector<256xf32> to vector<1x256xf32>
    %cst_4 = arith.constant 3.200000e+01 : f32
    %11 = vector.broadcast %cst_4 : f32 to vector<1x256xf32>
    %12 = arith.divf %10, %11 : vector<1x256xf32>
    %cst_5 = arith.constant 9.99999974E-6 : f32
    %13 = vector.broadcast %cst_5 : f32 to vector<1x256xf32>
    %14 = arith.addf %12, %13 : vector<1x256xf32>
    %15 = math.rsqrt %14 : vector<1x256xf32>
    %16 = vector.broadcast %15 : vector<1x256xf32> to vector<32x256xf32>
    %17 = arith.mulf %7, %16 : vector<32x256xf32>
    %c0_6 = arith.constant 0 : index
    %c0_7 = arith.constant 0 : index
    %18 = vector.load %arg3[%c0_6, %c0_7] : memref<32x1xf32, #tpu.memory_space<vmem>>, vector<32x1xf32>
    %19 = vector.broadcast %18 : vector<32x1xf32> to vector<32x256xf32>
    %20 = arith.mulf %17, %19 : vector<32x256xf32>
    %c0_8 = arith.constant 0 : index
    %c0_9 = arith.constant 0 : index
    %21 = vector.load %arg4[%c0_8, %c0_9] : memref<32x1xf32, #tpu.memory_space<vmem>>, vector<32x1xf32>
    %22 = vector.broadcast %21 : vector<32x1xf32> to vector<32x256xf32>
    %23 = arith.addf %20, %22 : vector<32x256xf32>
    %c0_10 = arith.constant 0 : index
    %c0_11 = arith.constant 0 : index
    %24 = vector.load %arg5[%c0_10, %c0_11] : memref<8x32xbf16, #tpu.memory_space<vmem>>, vector<8x32xbf16>
    %25 = arith.truncf %23 : vector<32x256xf32> to vector<32x256xbf16>
    %cst_12 = arith.constant dense<0.000000e+00> : vector<8x256xf32>
    %26 = tpu.matmul %24, %25, %cst_12 {dimension_numbers = #tpu.dot_dimension_numbers<[1], [0], [0], [1], [0, 0, 1, 1], [], []>} : vector<8x32xbf16>, vector<32x256xbf16>, vector<8x256xf32> -> vector<8x256xf32>
    %c0_13 = arith.constant 0 : index
    %c0_14 = arith.constant 0 : index
    %27 = vector.load %arg6[%c0_13, %c0_14] : memref<8x1xf32, #tpu.memory_space<vmem>>, vector<8x1xf32>
    %28 = vector.broadcast %27 : vector<8x1xf32> to vector<8x256xf32>
    %29 = arith.addf %26, %28 : vector<8x256xf32>
    %30 = arith.mulf %29, %29 : vector<8x256xf32>
    %31 = arith.mulf %29, %30 : vector<8x256xf32>
    %cst_15 = arith.constant 4.471500e-02 : f32
    %32 = vector.broadcast %cst_15 : f32 to vector<8x256xf32>
    %33 = arith.mulf %32, %31 : vector<8x256xf32>
    %34 = arith.addf %29, %33 : vector<8x256xf32>
    %cst_16 = arith.constant 0.797884583 : f32
    %35 = vector.broadcast %cst_16 : f32 to vector<8x256xf32>
    %36 = arith.mulf %35, %34 : vector<8x256xf32>
    %37 = math.tanh %36 : vector<8x256xf32>
    %cst_17 = arith.constant 1.000000e+00 : f32
    %38 = vector.broadcast %cst_17 : f32 to vector<8x256xf32>
    %39 = arith.addf %38, %37 : vector<8x256xf32>
    %cst_18 = arith.constant 5.000000e-01 : f32
    %40 = vector.broadcast %cst_18 : f32 to vector<8x256xf32>
    %41 = arith.mulf %40, %39 : vector<8x256xf32>
    %42 = arith.mulf %29, %41 : vector<8x256xf32>
    %c0_19 = arith.constant 0 : index
    %c0_20 = arith.constant 0 : index
    %43 = vector.load %arg7[%c0_19, %c0_20] : memref<8x1xf32, #tpu.memory_space<vmem>>, vector<8x1xf32>
    %44 = vector.broadcast %43 : vector<8x1xf32> to vector<8x256xf32>
    %45 = arith.mulf %42, %44 : vector<8x256xf32>
    %cst_21 = arith.constant dense<0.000000e+00> : vector<256xf32>
    %46 = vector.multi_reduction <add>, %45, %cst_21 [0] : vector<8x256xf32> to vector<256xf32>
    %47 = vector.shape_cast %46 : vector<256xf32> to vector<1x256xf32>
    %c0_22 = arith.constant 0 : index
    %c0_23 = arith.constant 0 : index
    %48 = vector.load %arg8[%c0_22, %c0_23] : memref<1x1xf32, #tpu.memory_space<vmem>>, vector<1x1xf32>
    %49 = vector.broadcast %48 : vector<1x1xf32> to vector<1x256xf32>
    %50 = arith.addf %47, %49 : vector<1x256xf32>
    %51 = arith.negf %50 : vector<1x256xf32>
    %52 = math.exp %51 : vector<1x256xf32>
    %cst_24 = arith.constant 1.000000e+00 : f32
    %53 = vector.broadcast %cst_24 : f32 to vector<1x256xf32>
    %54 = arith.addf %53, %52 : vector<1x256xf32>
    %55 = arith.divf %53, %54 : vector<1x256xf32>
    %c0_25 = arith.constant 0 : index
    %c0_26 = arith.constant 0 : index
    %c0_27 = arith.constant 0 : index
    %56 = vector.load %arg9[%c0_25, %c0_26, %c0_27] : memref<1x1x256xf32, #tpu.memory_space<vmem>>, vector<1x1x256xf32>
    %57 = vector.shape_cast %56 : vector<1x1x256xf32> to vector<1x256xf32>
    %58 = vector.shape_cast %55 : vector<1x256xf32> to vector<1x1x256xf32>
    tpu.vector_store %arg9[%c0_25, %c0_26, %c0_27], %58 {strides = array<i32>} : memref<1x1x256xf32, #tpu.memory_space<vmem>>, vector<1x1x256xf32>,
    return
  }
  func.func @transform_0(%arg0: i32, %arg1: i32) -> (i32, i32, i32) {
    %c0_i32 = arith.constant 0 : i32
    %c0_i32_0 = arith.constant 0 : i32
    return %arg0, %c0_i32, %arg1 : i32, i32, i32
  }
  func.func @transform_1(%arg0: i32, %arg1: i32) -> (i32, i32) {
    %c0_i32 = arith.constant 0 : i32
    %c0_i32_0 = arith.constant 0 : i32
    %c0_i32_1 = arith.constant 0 : i32
    return %c0_i32, %c0_i32_0 : i32, i32
  }
  func.func @transform_2(%arg0: i32, %arg1: i32) -> (i32, i32) {
    %c0_i32 = arith.constant 0 : i32
    %c0_i32_0 = arith.constant 0 : i32
    %c0_i32_1 = arith.constant 0 : i32
    return %c0_i32, %c0_i32_0 : i32, i32
  }
  func.func @transform_3(%arg0: i32, %arg1: i32) -> (i32, i32) {
    %c0_i32 = arith.constant 0 : i32
    %c0_i32_0 = arith.constant 0 : i32
    %c0_i32_1 = arith.constant 0 : i32
    return %c0_i32, %c0_i32_0 : i32, i32
  }
  func.func @transform_4(%arg0: i32, %arg1: i32) -> (i32, i32) {
    %c0_i32 = arith.constant 0 : i32
    %c0_i32_0 = arith.constant 0 : i32
    %c0_i32_1 = arith.constant 0 : i32
    return %c0_i32, %c0_i32_0 : i32, i32
  }
  func.func @transform_5(%arg0: i32, %arg1: i32) -> (i32, i32) {
    %c0_i32 = arith.constant 0 : i32
    %c0_i32_0 = arith.constant 0 : i32
    %c0_i32_1 = arith.constant 0 : i32
    return %c0_i32, %c0_i32_0 : i32, i32
  }
  func.func @transform_6(%arg0: i32, %arg1: i32) -> (i32, i32) {
    %c0_i32 = arith.constant 0 : i32
    %c0_i32_0 = arith.constant 0 : i32
    %c0_i32_1 = arith.constant 0 : i32
    return %c0_i32, %c0_i32_0 : i32, i32
  }
  func.func @transform_7(%arg0: i32, %arg1: i32) -> (i32, i32, i32) {
    %c0_i32 = arith.constant 0 : i32
    %c0_i32_0 = arith.constant 0 : i32
    return %arg0, %c0_i32, %arg1 : i32, i32, i32
  }
}

</mosaic_0001>

<llo_original>
// kernel: tpu_custom_call.1
$region0: #{tpu_custom_call.1}
  #allocation0 [shape = 'u32[]', space=smem, size = 0x4, offset = 0x4, fixed_abs, tag = 'smem constant byte address 0x4 - core index']
  #allocation1 [shape = 'u32[144,128]{1,0:T(1,128)}', space=vmem, size = 0x12000, scoped, tag = 'internal scratch']
  #allocation2 [shape = 'f32[1,1]{1,0:T(1,128)S(1)}', space=vmem, size = 0x200, scoped, tag = 'scoped memory for tpu_custom_call.1']
  %s0 = inlined_call_operand.hbm [shape: f32[2,32,256], index: 0, kind: input, shape index: {}]
  %s1 = inlined_call_operand.vmem [shape: f32[32,1], index: 1, kind: input, shape index: {}]
  %s2 = inlined_call_operand.vmem [shape: f32[32,1], index: 2, kind: input, shape index: {}]
  %s3 = inlined_call_operand.vmem [shape: bf16[8,32], index: 3, kind: input, shape index: {}]
  %s4 = inlined_call_operand.vmem [shape: f32[8,1], index: 4, kind: input, shape index: {}]
  %s5 = inlined_call_operand.vmem [shape: f32[8,1], index: 5, kind: input, shape index: {}]
  %s6 = inlined_call_operand.<no memory space> [shape: f32[1,1], index: 6, kind: input, shape index: {}]
  %s7 = inlined_call_operand.hbm [shape: f32[2,1,256], index: 7, kind: output, shape index: {}]
  %s8 = sld [smem:[#allocation0]]
  $region65: #{tpu_custom_call.1} parent=0
    _
  %s10 = ssub.s32 1, %s8
  %s11 = scalar_select 0, %s10, %s8
  %v12 = vstv %s6
  %13 = vst [vmem:[#allocation2] sm:$0x1] %v12
  $region1: #{tpu_custom_call.1} parent=0
    #allocation3 [shape = 'u8[65536]{0}', space=vmem, size = 0x10000, scoped, tag = 'input window, operand 0']
    #allocation4 [shape = 's32[2]{0}', space=sflag, size = 0x8, scoped, tag = 'scoped memory for tpu_custom_call.1']
    #allocation5 [shape = 's32[2]{0}', space=sflag, size = 0x8, scoped, tag = 'scoped memory for tpu_custom_call.1']
    #allocation6 [shape = 'u8[2048]{0}', space=vmem, size = 0x800, scoped, tag = 'output window, operand 0']
    %14 = vsyncpa [#allocation4], 0
    %s15 = scalar_lea.sflag [#allocation4], 1
    %16 = vsyncpa %s15, 0
    %17 = vsyncpa [#allocation5], 0
    %s18 = scalar_lea.sflag [#allocation5], 1
    %19 = vsyncpa %s18, 0
    loop: start=0, step=1, limit=4
    $region2: #{tpu_custom_call.1} parent=1 // loop_pre_header
      _
    $region3: #{tpu_custom_call.1} parent=1 // loop_header
      %s21 = sphi 0, %s25
      %p22 = scmp.ge.s32.totalorder %s21, 4
      %s28 = sphi 0, %s40
      %s29 = sphi 0, %s36
      %s30 = sphi 0, %s28
      %s31 = sphi 0, %s29
      %s32 = sphi 0, %s30
      %s33 = sphi 0, %s31
      %s45 = sphi 0, %s47
      %s48 = sphi 0, %s45
      %s49 = sphi 0, %s48
      %s65 = sphi 0, %s49
      %s69 = sphi 0, %s69
      %s71 = sphi 0, %s69
      %s72 = sphi 0, %s71
      %s86 = sphi 0, %s72
      %s90 = sphi 0, %s90
      %s92 = sphi 0, %s90
      %s93 = sphi 0, %s92
      %s107 = sphi 0, %s93
      %s111 = sphi 0, %s111
      %s113 = sphi 0, %s111
      %s114 = sphi 0, %s113
      %s128 = sphi 0, %s114
      %s132 = sphi 0, %s132
      %s134 = sphi 0, %s132
      %s135 = sphi 0, %s134
      %s149 = sphi 0, %s135
      %s153 = sphi 0, %s153
      %s155 = sphi 0, %s153
      %s156 = sphi 0, %s155
      %s170 = sphi 0, %s156
      %s174 = sphi 0, %s174
      %s176 = sphi 0, %s174
      %s177 = sphi 0, %s176
      %s191 = sphi 0, %s177
      %s199 = sphi 0, %s201
      %s202 = sphi 0, %s199
      %s203 = sphi 0, %s202
      %s219 = sphi 0, %s203
    $region4: #{tpu_custom_call.1} parent=1 // loop_header_branch
      %24 = sbr.rel (%p22) target = $region8
    $region5: #{tpu_custom_call.1} parent=1 // loop_body
      %s26 = ssub.s32 %s21, 1
      %s27 = ssub.s32 %s21, 2
      %s34 = sadd.s32 1, %s29
      %p35 = scmp.ge.s32.totalorder %s34, 1
      %s36 = scalar_select %p35, 0, %s34
      %s37 = sadd.s32 1, %s28
      %s38 = scalar_select %p35, %s37, %s28
      %p39 = scmp.ge.s32.totalorder %s38, 2
      %s40 = scalar_select %p39, 0, %s38
      %s41 = ssub.s32 %s28, %s40
      %s42 = ssub.s32 %s29, %s36
      %s43 = sor.u32 %s41, %s42
      %p44 = scmp.eq.s32.totalorder %s43, 0
      %s46 = sadd.s32 %s45, 1
      %s47 = scalar_select %p44, %s45, %s46
      %p50 = pneg %p44
      %p51 = scmp.eq.s32.totalorder %s21, 1
      %p52 = por %p50, %p51
      %p53 = scmp.ne.s32.totalorder %s45, %s48
      %p54 = scmp.eq.s32.totalorder %s21, 0
      %p55 = por %p53, %p54
      %p56 = scmp.ne.s32.totalorder %s45, %s48
      %p57 = scmp.eq.s32.totalorder %s26, 1
      %p58 = por %p56, %p57
      %p59 = scmp.ne.s32.totalorder %s48, %s49
      %p60 = scmp.eq.s32.totalorder %s26, 0
      %p61 = por %p59, %p60
      %p62 = scmp.ne.s32.totalorder %s48, %s49
      %p63 = scmp.eq.s32.totalorder %s27, 1
      %p64 = por %p62, %p63
      %p66 = scmp.ne.s32.totalorder %s49, %s65
      %p67 = scmp.eq.s32.totalorder %s27, 0
      %p68 = por %p66, %p67
      %s70 = sadd.s32 %s69, 1
      %p73 = scmp.eq.s32.totalorder %s21, 1
      %p74 = scmp.ne.s32.totalorder %s69, %s71
      %p75 = scmp.eq.s32.totalorder %s21, 0
      %p76 = por %p74, %p75
      %p77 = scmp.ne.s32.totalorder %s69, %s71
      %p78 = scmp.eq.s32.totalorder %s26, 1
      %p79 = por %p77, %p78
      %p80 = scmp.ne.s32.totalorder %s71, %s72
      %p81 = scmp.eq.s32.totalorder %s26, 0
      %p82 = por %p80, %p81
      %p83 = scmp.ne.s32.totalorder %s71, %s72
      %p84 = scmp.eq.s32.totalorder %s27, 1
      %p85 = por %p83, %p84
      %p87 = scmp.ne.s32.totalorder %s72, %s86
      %p88 = scmp.eq.s32.totalorder %s27, 0
      %p89 = por %p87, %p88
      %s91 = sadd.s32 %s90, 1
      %p94 = scmp.eq.s32.totalorder %s21, 1
      %p95 = scmp.ne.s32.totalorder %s90, %s92
      %p96 = scmp.eq.s32.totalorder %s21, 0
      %p97 = por %p95, %p96
      %p98 = scmp.ne.s32.totalorder %s90, %s92
      %p99 = scmp.eq.s32.totalorder %s26, 1
      %p100 = por %p98, %p99
      %p101 = scmp.ne.s32.totalorder %s92, %s93
      %p102 = scmp.eq.s32.totalorder %s26, 0
      %p103 = por %p101, %p102
      %p104 = scmp.ne.s32.totalorder %s92, %s93
      %p105 = scmp.eq.s32.totalorder %s27, 1
      %p106 = por %p104, %p105
      %p108 = scmp.ne.s32.totalorder %s93, %s107
      %p109 = scmp.eq.s32.totalorder %s27, 0
      %p110 = por %p108, %p109
      %s112 = sadd.s32 %s111, 1
      %p115 = scmp.eq.s32.totalorder %s21, 1
      %p116 = scmp.ne.s32.totalorder %s111, %s113
      %p117 = scmp.eq.s32.totalorder %s21, 0
      %p118 = por %p116, %p117
      %p119 = scmp.ne.s32.totalorder %s111, %s113
      %p120 = scmp.eq.s32.totalorder %s26, 1
      %p121 = por %p119, %p120
      %p122 = scmp.ne.s32.totalorder %s113, %s114
      %p123 = scmp.eq.s32.totalorder %s26, 0
      %p124 = por %p122, %p123
      %p125 = scmp.ne.s32.totalorder %s113, %s114
      %p126 = scmp.eq.s32.totalorder %s27, 1
      %p127 = por %p125, %p126
      %p129 = scmp.ne.s32.totalorder %s114, %s128
      %p130 = scmp.eq.s32.totalorder %s27, 0
      %p131 = por %p129, %p130
      %s133 = sadd.s32 %s132, 1
      %p136 = scmp.eq.s32.totalorder %s21, 1
      %p137 = scmp.ne.s32.totalorder %s132, %s134
      %p138 = scmp.eq.s32.totalorder %s21, 0
      %p139 = por %p137, %p138
      %p140 = scmp.ne.s32.totalorder %s132, %s134
      %p141 = scmp.eq.s32.totalorder %s26, 1
      %p142 = por %p140, %p141
      %p143 = scmp.ne.s32.totalorder %s134, %s135
      %p144 = scmp.eq.s32.totalorder %s26, 0
      %p145 = por %p143, %p144
      %p146 = scmp.ne.s32.totalorder %s134, %s135
      %p147 = scmp.eq.s32.totalorder %s27, 1
      %p148 = por %p146, %p147
      %p150 = scmp.ne.s32.totalorder %s135, %s149
      %p151 = scmp.eq.s32.totalorder %s27, 0
      %p152 = por %p150, %p151
      %s154 = sadd.s32 %s153, 1
      %p157 = scmp.eq.s32.totalorder %s21, 1
      %p158 = scmp.ne.s32.totalorder %s153, %s155
      %p159 = scmp.eq.s32.totalorder %s21, 0
      %p160 = por %p158, %p159
      %p161 = scmp.ne.s32.totalorder %s153, %s155
      %p162 = scmp.eq.s32.totalorder %s26, 1
      %p163 = por %p161, %p162
      %p164 = scmp.ne.s32.totalorder %s155, %s156
      %p165 = scmp.eq.s32.totalorder %s26, 0
      %p166 = por %p164, %p165
      %p167 = scmp.ne.s32.totalorder %s155, %s156
      %p168 = scmp.eq.s32.totalorder %s27, 1
      %p169 = por %p167, %p168
      %p171 = scmp.ne.s32.totalorder %s156, %s170
      %p172 = scmp.eq.s32.totalorder %s27, 0
      %p173 = por %p171, %p172
      %s175 = sadd.s32 %s174, 1
      %p178 = scmp.eq.s32.totalorder %s21, 1
      %p179 = scmp.ne.s32.totalorder %s174, %s176
      %p180 = scmp.eq.s32.totalorder %s21, 0
      %p181 = por %p179, %p180
      %p182 = scmp.ne.s32.totalorder %s174, %s176
      %p183 = scmp.eq.s32.totalorder %s26, 1
      %p184 = por %p182, %p183
      %p185 = scmp.ne.s32.totalorder %s176, %s177
      %p186 = scmp.eq.s32.totalorder %s26, 0
      %p187 = por %p185, %p186
      %p188 = scmp.ne.s32.totalorder %s176, %s177
      %p189 = scmp.eq.s32.totalorder %s27, 1
      %p190 = por %p188, %p189
      %p192 = scmp.ne.s32.totalorder %s177, %s191
      %p193 = scmp.eq.s32.totalorder %s27, 0
      %p194 = por %p192, %p193
      %s195 = ssub.s32 %s28, %s40
      %s196 = ssub.s32 %s29, %s36
      %s197 = sor.u32 %s195, %s196
      %p198 = scmp.eq.s32.totalorder %s197, 0
      %s200 = sadd.s32 %s199, 1
      %s201 = scalar_select %p198, %s199, %s200
      %p204 = pneg %p198
      %p205 = scmp.eq.s32.totalorder %s21, 1
      %p206 = por %p204, %p205
      %p207 = scmp.ne.s32.totalorder %s199, %s202
      %p208 = scmp.eq.s32.totalorder %s21, 0
      %p209 = por %p207, %p208
      %p210 = scmp.ne.s32.totalorder %s199, %s202
      %p211 = scmp.eq.s32.totalorder %s26, 1
      %p212 = por %p210, %p211
      %p213 = scmp.ne.s32.totalorder %s202, %s203
      %p214 = scmp.eq.s32.totalorder %s26, 0
      %p215 = por %p213, %p214
      %p216 = scmp.ne.s32.totalorder %s202, %s203
      %p217 = scmp.eq.s32.totalorder %s27, 1
      %p218 = por %p216, %p217
      %p220 = scmp.ne.s32.totalorder %s203, %s219
      %p221 = scmp.eq.s32.totalorder %s27, 0
      %p222 = por %p220, %p221
      %p223 = scmp.le.s32.totalorder 1, %s21
      %p224 = scmp.lt.s32.totalorder %s21, 3
      %p225 = pnand %p223, %p224
      %p226 = pneg %p225
      // Predicated region
      $region9: #{tpu_custom_call.1} parent=5 // pred_check
        _
      $region10: #{tpu_custom_call.1} parent=5 // pred_check_branch
        %228 = sbr.rel (%p225) target = $region12
      $region11: #{tpu_custom_call.1} parent=5 // pred_region
        %s229 = ssub.s32 %s21, 1
        // Predicated region
        $region13: #{tpu_custom_call.1} parent=11 // pred_check
          %p230 = pneg %p82
        $region14: #{tpu_custom_call.1} parent=11 // pred_check_branch
          %232 = sbr.rel (%p230) target = $region16
        $region15: #{tpu_custom_call.1} parent=11 // pred_region
          _
        $region16: #{tpu_custom_call.1} parent=11 // pred_fallthru
          _
        // Predicated region
        $region17: #{tpu_custom_call.1} parent=11 // pred_check
          %p233 = pneg %p103
        $region18: #{tpu_custom_call.1} parent=11 // pred_check_branch
          %235 = sbr.rel (%p233) target = $region20
        $region19: #{tpu_custom_call.1} parent=11 // pred_region
          _
        $region20: #{tpu_custom_call.1} parent=11 // pred_fallthru
          _
        // Predicated region
        $region21: #{tpu_custom_call.1} parent=11 // pred_check
          %p236 = pneg %p124
        $region22: #{tpu_custom_call.1} parent=11 // pred_check_branch
          %238 = sbr.rel (%p236) target = $region24
        $region23: #{tpu_custom_call.1} parent=11 // pred_region
          _
        $region24: #{tpu_custom_call.1} parent=11 // pred_fallthru
          _
        // Predicated region
        $region25: #{tpu_custom_call.1} parent=11 // pred_check
          %p239 = pneg %p145
        $region26: #{tpu_custom_call.1} parent=11 // pred_check_branch
          %241 = sbr.rel (%p239) target = $region28
        $region27: #{tpu_custom_call.1} parent=11 // pred_region
          _
        $region28: #{tpu_custom_call.1} parent=11 // pred_fallthru
          _
        // Predicated region
        $region29: #{tpu_custom_call.1} parent=11 // pred_check
          %p242 = pneg %p166
        $region30: #{tpu_custom_call.1} parent=11 // pred_check_branch
          %244 = sbr.rel (%p242) target = $region32
        $region31: #{tpu_custom_call.1} parent=11 // pred_region
          _
        $region32: #{tpu_custom_call.1} parent=11 // pred_fallthru
          _
        // Predicated region
        $region33: #{tpu_custom_call.1} parent=11 // pred_check
          %p245 = pneg %p187
        $region34: #{tpu_custom_call.1} parent=11 // pred_check_branch
          %247 = sbr.rel (%p245) target = $region36
        $region35: #{tpu_custom_call.1} parent=11 // pred_region
          _
        $region36: #{tpu_custom_call.1} parent=11 // pred_fallthru
          _
      $region12: #{tpu_custom_call.1} parent=5 // pred_fallthru
        _
      %p248 = scmp.lt.s32.totalorder %s21, 2
      // Predicated region
      $region37: #{tpu_custom_call.1} parent=5 // pred_check
        %p249 = pneg %p248
      $region38: #{tpu_custom_call.1} parent=5 // pred_check_branch
        %251 = sbr.rel (%p249) target = $region40
      $region39: #{tpu_custom_call.1} parent=5 // pred_region
        // Predicated region
        $region41: #{tpu_custom_call.1} parent=39 // pred_check
          %p252 = pneg %p55
        $region42: #{tpu_custom_call.1} parent=39 // pred_check_branch
          %254 = sbr.rel (%p252) target = $region44
        $region43: #{tpu_custom_call.1} parent=39 // pred_region
          %s255 = sand.u32 %s45, 1
          %s256 = scalar_lea.sflag [#allocation4], %s255
          %s257 = sand.u32 %s45, 1
          %s258 = smul.addr %s257, 64
          %s259 = scalar_lea.vmem [#allocation3], %s258
          %s260 = smul.u32 2, %s29
          %s262 = ssub.s32 1024, 1024
          %263 = vsyncadd %s256, %s262
          %s264 = smul.addr %s28, 8
          %s265 = sadd.s32 %s260, %s264
          %s266 = smul.addr %s265, 128
          %s267 = scalar_lea.hbm %s0, %s266
          %s268 = sshll.u32 %s259, 4
          %s269 = int_to_ptr.vmem [resolvable:$true] %s268
          %274 = dma.hbm_to_vmem [thread:$0]  %s267, 1024, %s269, %s256, 256, 256, 16
        $region44: #{tpu_custom_call.1} parent=39 // pred_fallthru
          _
      $region40: #{tpu_custom_call.1} parent=5 // pred_fallthru
        _
      %p275 = scmp.le.s32.totalorder 1, %s21
      %p276 = scmp.lt.s32.totalorder %s21, 3
      %p277 = pnand %p275, %p276
      %p278 = pneg %p277
      // Predicated region
      $region45: #{tpu_custom_call.1} parent=5 // pred_check
        _
      $region46: #{tpu_custom_call.1} parent=5 // pred_check_branch
        %280 = sbr.rel (%p277) target = $region48
      $region47: #{tpu_custom_call.1} parent=5 // pred_region
        %s281 = ssub.s32 %s21, 1
        %s282 = sand.u32 %s48, 1
        %s283 = scalar_lea.sflag [#allocation4], %s282
        %s284 = sand.u32 %s48, 1
        %s285 = smul.addr %s284, 64
        %s286 = scalar_lea.vmem [#allocation3], %s285
        // Predicated region
        $region49: #{tpu_custom_call.1} parent=47 // pred_check
          %p287 = pneg %p61
        $region50: #{tpu_custom_call.1} parent=47 // pred_check_branch
          %289 = sbr.rel (%p287) target = $region52
        $region51: #{tpu_custom_call.1} parent=47 // pred_region
          %290 = dma.done %s283, 1024
        $region52: #{tpu_custom_call.1} parent=47 // pred_fallthru
          _
        %s291 = sand.u32 %s48, 1
        %s292 = scalar_lea.sflag [#allocation4], %s291
        %s293 = sand.u32 %s48, 1
        %s294 = smul.addr %s293, 64
        %s295 = scalar_lea.vmem [#allocation3], %s294
        %p296 = pneg %p61
        %p297 = pneg %p58
        %p298 = pneg %p82
        %p299 = pneg %p79
        %p300 = pneg %p103
        %p301 = pneg %p100
        %p302 = pneg %p124
        %p303 = pneg %p121
        %p304 = pneg %p145
        %p305 = pneg %p142
        %p306 = pneg %p166
        %p307 = pneg %p163
        %p308 = pneg %p187
        %p309 = pneg %p184
        %p310 = pneg %p215
        %p311 = pneg %p212
        %s312 = sand.u32 %s202, 1
        %s313 = scalar_lea.sflag [#allocation5], %s312
        %s314 = sand.u32 %s202, 1
        %s315 = smul.addr %s314, 2
        %s316 = scalar_lea.vmem [#allocation6], %s315
        %s317 = smul.u32 2, %s31
        %s318 = smul.u32 2, %s31
        %v320 = vld [vmem:[%s286] sm:$0xff]
        %v321 = vld [vmem:[%s286 + $0x8] sm:$0xff]
        %v322 = vld [vmem:[%s286 + $0x10] sm:$0xff]
        %v323 = vld [vmem:[%s286 + $0x18] sm:$0xff]
        %v324 = vld [vmem:[%s286 + $0x20] sm:$0xff]
        %v325 = vld [vmem:[%s286 + $0x28] sm:$0xff]
        %v326 = vld [vmem:[%s286 + $0x30] sm:$0xff]
        %v327 = vld [vmem:[%s286 + $0x38] sm:$0xff]
        %v328 = vadd.f32 %v320, %v322
        %v329 = vadd.f32 %v328, %v324
        %v330 = vadd.f32 %v329, %v326
        %v331 = vrot.slane %v330, 4
        %v332 = vadd.f32 %v330, %v331
        %v333 = vrot.slane %v332, 2
        %v334 = vadd.f32 %v332, %v333
        %v335 = vrot.slane %v334, 1
        %v336 = vadd.f32 %v334, %v335
        %v337 = vadd.f32 %v321, %v323
        %v338 = vadd.f32 %v337, %v325
        %v339 = vadd.f32 %v338, %v327
        %v340 = vrot.slane %v339, 4
        %v341 = vadd.f32 %v339, %v340
        %v342 = vrot.slane %v341, 2
        %v343 = vadd.f32 %v341, %v342
        %v344 = vrot.slane %v343, 1
        %v345 = vadd.f32 %v343, %v344
        %v346 = vrcp.pop 32.0
        %v347 = vmul.f32 %v336, %v346
        %v348 = vmul.f32 %v345, %v346
        %v349 = vsub.f32 %v320, %v347
        %v350 = vsub.f32 %v321, %v348
        %v351 = vsub.f32 %v322, %v347
        %v352 = vsub.f32 %v323, %v348
        %v353 = vsub.f32 %v324, %v347
        %v354 = vsub.f32 %v325, %v348
        %v355 = vsub.f32 %v326, %v347
        %v356 = vsub.f32 %v327, %v348
        %v357 = vmul.f32 %v349, %v349
        %v358 = vmul.f32 %v350, %v350
        %v359 = vmul.f32 %v351, %v351
        %v360 = vmul.f32 %v352, %v352
        %v361 = vmul.f32 %v353, %v353
        %v362 = vmul.f32 %v354, %v354
        %v363 = vmul.f32 %v355, %v355
        %v364 = vmul.f32 %v356, %v356
        %v365 = vadd.f32 %v357, %v359
        %v366 = vadd.f32 %v365, %v361
        %v367 = vadd.f32 %v366, %v363
        %v368 = vrot.slane %v367, 4
        %v369 = vadd.f32 %v367, %v368
        %v370 = vrot.slane %v369, 2
        %v371 = vadd.f32 %v369, %v370
        %v372 = vrot.slane %v371, 1
        %v373 = vadd.f32 %v371, %v372
        %v374 = vadd.f32 %v358, %v360
        %v375 = vadd.f32 %v374, %v362
        %v376 = vadd.f32 %v375, %v364
        %v377 = vrot.slane %v376, 4
        %v378 = vadd.f32 %v376, %v377
        %v379 = vrot.slane %v378, 2
        %v380 = vadd.f32 %v378, %v379
        %v381 = vrot.slane %v380, 1
        %v382 = vadd.f32 %v380, %v381
        %v383 = vmul.f32 %v373, %v346
        %v384 = vmul.f32 %v382, %v346
        %v385 = vadd.f32 %v383, 1e-05
        %v386 = vadd.f32 %v384, 1e-05
        %v387 = vrsqrt.pop %v385
        %v388 = vrsqrt.pop %v386
        %v389 = vmul.f32 %v349, %v387
        %v390 = vmul.f32 %v350, %v388
        %v391 = vmul.f32 %v351, %v387
        %v392 = vmul.f32 %v352, %v388
        %v393 = vmul.f32 %v353, %v387
        %v394 = vmul.f32 %v354, %v388
        %v395 = vmul.f32 %v355, %v387
        %v396 = vmul.f32 %v356, %v388
        %v397 = vld [vmem:[%s1] sm:$0xff]
        %v398 = vld [vmem:[%s1 + $0x8] sm:$0xff]
        %v399 = vld [vmem:[%s1 + $0x10] sm:$0xff]
        %v400 = vld [vmem:[%s1 + $0x18] sm:$0xff]
        %402 = vset.pattern.permute.xlu0 0
        %403 = vperm.xlu0 %402, %v397
        %v404 = vpop.permute.xlu0 %403
        %407 = vset.pattern.permute.xlu0 0
        %408 = vperm.xlu0 %407, %v398
        %v409 = vpop.permute.xlu0 %408
        %412 = vset.pattern.permute.xlu0 0
        %413 = vperm.xlu0 %412, %v399
        %v414 = vpop.permute.xlu0 %413
        %417 = vset.pattern.permute.xlu0 0
        %418 = vperm.xlu0 %417, %v400
        %v419 = vpop.permute.xlu0 %418
        %v421 = vmul.f32 %v389, %v404
        %v422 = vmul.f32 %v390, %v404
        %v423 = vmul.f32 %v391, %v409
        %v424 = vmul.f32 %v392, %v409
        %v425 = vmul.f32 %v393, %v414
        %v426 = vmul.f32 %v394, %v414
        %v427 = vmul.f32 %v395, %v419
        %v428 = vmul.f32 %v396, %v419
        %v429 = vld [vmem:[%s2] sm:$0xff]
        %v430 = vld [vmem:[%s2 + $0x8] sm:$0xff]
        %v431 = vld [vmem:[%s2 + $0x10] sm:$0xff]
        %v432 = vld [vmem:[%s2 + $0x18] sm:$0xff]
        %434 = vset.pattern.permute.xlu0 0
        %435 = vperm.xlu0 %434, %v429
        %v436 = vpop.permute.xlu0 %435
        %439 = vset.pattern.permute.xlu0 0
        %440 = vperm.xlu0 %439, %v430
        %v441 = vpop.permute.xlu0 %440
        %444 = vset.pattern.permute.xlu0 0
        %445 = vperm.xlu0 %444, %v431
        %v446 = vpop.permute.xlu0 %445
        %449 = vset.pattern.permute.xlu0 0
        %450 = vperm.xlu0 %449, %v432
        %v451 = vpop.permute.xlu0 %450
        %v453 = vadd.f32 %v421, %v436
        %v454 = vadd.f32 %v422, %v436
        %v455 = vadd.f32 %v423, %v441
        %v456 = vadd.f32 %v424, %v441
        %v457 = vadd.f32 %v425, %v446
        %v458 = vadd.f32 %v426, %v446
        %v459 = vadd.f32 %v427, %v451
        %v460 = vadd.f32 %v428, %v451
        %v461 = vld [vmem:[%s3] sm:$0xf]
        %v462 = vpack.c.bf16 %v455, %v453
        %v463 = vpack.c.bf16 %v456, %v454
        %v464 = vpack.c.bf16 %v459, %v457
        %v465 = vpack.c.bf16 %v460, %v458
        %v466 = vld [vmem:[%s4] sm:$0xff]
        %468 = vset.pattern.permute.xlu0 0
        %469 = vperm.xlu0 %468, %v466
        %v470 = vpop.permute.xlu0 %469
        %vm472 = vcmask 261120
        %v474 = vsel %vm472, %v461, 0
        %476 = vmatprep.subr.bf16.mxu0 0
        %477 = vmatpush1.bf16.msra.mxu0 0
        %478 = vmatprep.subr.bf16.mxu0 0
        %479 = vmatpush1.bf16.msra.mxu0 0
        %480 = vmatprep.subr.bf16.mxu0 0
        %481 = vmatpush1.bf16.msra.mxu0 0
        %482 = vmatprep.subr.bf16.mxu0 0
        %483 = vmatpush1.bf16.msra.mxu0 0
        %484 = vmatprep.subr.bf16.mxu0 0
        %485 = vmatpush1.bf16.msra.mxu0 0
        %486 = vmatprep.subr.bf16.mxu0 0
        %487 = vmatpush1.bf16.msra.mxu0 0
        %488 = vmatprep.subr.bf16.mxu0 %v465
        %489 = vmatpush1.bf16.msra.mxu0 %v464
        %490 = vmatprep.subr.bf16.mxu0 %v463
        %491 = vmatpush1.bf16.msra.mxu0 %v462
        %492 = vmatprep.subr.bf16.mxu0 0
        %493 = vmatpush2.bf16.msra.mxu0 0
        %494 = vmatprep.subr.bf16.mxu0 0
        %495 = vmatpush2.bf16.msra.mxu0 0
        %496 = vmatprep.subr.bf16.mxu0 0
        %497 = vmatpush2.bf16.msra.mxu0 0
        %498 = vmatprep.subr.bf16.mxu0 0
        %499 = vmatpush2.bf16.msra.mxu0 0
        %500 = vmatprep.subr.bf16.mxu0 0
        %501 = vmatpush2.bf16.msra.mxu0 0
        %502 = vmatprep.subr.bf16.mxu0 0
        %503 = vmatpush2.bf16.msra.mxu0 0
        %504 = vmatprep.subr.bf16.mxu0 0
        %505 = vmatpush2.bf16.msra.mxu0 0
        %506 = vmatprep.subr.bf16.mxu0 0
        %507 = vmatpush2.bf16.msra.mxu0 0
        %508 = vmatprep.mubr.bf16.mxu0 0
        %509 = vmatmul.mubr.bf16.gmra.mxu0 %v474
        %v510 = vpop.f32.mrf.mxu0
        %v511 = vadd.f32 %v470, %v510
        %v512 = vpop.f32.mrf.mxu0
        %v513 = vadd.f32 %v470, %v512
        %v514 = vpop.f32.mrf.mxu0
        %v515 = vpop.f32.mrf.mxu0
        %516 = vdwg.mxu0
        %v517 = vmul.f32 %v511, %v511
        %v518 = vmul.f32 %v513, %v513
        %v519 = vmul.f32 %v511, %v517
        %v520 = vmul.f32 %v513, %v518
        %v521 = vmul.f32 %v519, 0.044715
        %v522 = vmul.f32 %v520, 0.044715
        %v523 = vadd.f32 %v511, %v521
        %v524 = vadd.f32 %v513, %v522
        %v525 = vmul.f32 %v523, 0.7978846
        %v526 = vmul.f32 %v524, 0.7978846
        %v527 = vtanh.pop %v525
        %v528 = vtanh.pop %v526
        %v529 = vadd.f32 %v527, 1.0
        %v530 = vadd.f32 %v528, 1.0
        %v531 = vmul.f32 %v529, 0.5
        %v532 = vmul.f32 %v530, 0.5
        %v533 = vmul.f32 %v511, %v531
        %v534 = vmul.f32 %v513, %v532
        %v535 = vld [vmem:[%s5] sm:$0xff]
        %537 = vset.pattern.permute.xlu0 0
        %538 = vperm.xlu0 %537, %v535
        %v539 = vpop.permute.xlu0 %538
        %v541 = vmul.f32 %v533, %v539
        %v542 = vmul.f32 %v534, %v539
        %v543 = vrot.slane %v541, 4
        %v544 = vadd.f32 %v541, %v543
        %v545 = vrot.slane %v544, 2
        %v546 = vadd.f32 %v544, %v545
        %v547 = vrot.slane %v546, 1
        %v548 = vadd.f32 %v546, %v547
        %v549 = vrot.slane %v542, 4
        %v550 = vadd.f32 %v542, %v549
        %v551 = vrot.slane %v550, 2
        %v552 = vadd.f32 %v550, %v551
        %v553 = vrot.slane %v552, 1
        %v554 = vadd.f32 %v552, %v553
        %v555 = vld [vmem:[#allocation2] sm:$0x1]
        %557 = vset.pattern.permute.xlu0 0
        %558 = vperm.xlu0 %557, %v555
        %v559 = vpop.permute.xlu0 %558
        %v561 = vlaneseq
        %v562 = vshrl.u32 %v561, 7
        %v563 = vsub.s32 0, %v562
        %v564 = vrot.slane %v559, %v563
        %v565 = vadd.f32 %v548, %v564
        %v566 = vadd.f32 %v554, %v564
        %v567 = vxor.u32 %v565, 2147483648
        %v568 = vxor.u32 %v566, 2147483648
        %v569 = vmul.f32 %v567, 1.442695
        %v570 = vpow.pop %v569
        %v571 = vmul.f32 %v568, 1.442695
        %v572 = vpow.pop %v571
        %v573 = vadd.f32 %v570, 1.0
        %v574 = vadd.f32 %v572, 1.0
        %v575 = vrcp.pop %v573
        %v576 = vmul.f32 1.0, %v575
        %v577 = vrcp.pop %v574
        %v578 = vmul.f32 1.0, %v577
        %v581 = vcombine.low %v576, %v578
        %v583 = vunpack.c.l.s4 1966171168
        %v584 = vunpack.c.0.s8 %v583
        %v585 = vlaneseq
        %v586 = vshrl.u32 %v585, 7
        %v587 = vsub.s32 %v584, %v586
        %v588 = vrot.slane %v581, %v587
        %v590 = vunpack.c.l.s4 1966171168
        %v591 = vunpack.c.0.s8 %v590
        %v592 = vlaneseq
        %v593 = vshrl.u32 %v592, 7
        %v594 = vsub.s32 %v591, %v593
        %v595 = vrot.slane %v588, %v594
        %v597 = vlaneseq
        %vm598 = vcmp.ge.s32.totalorder %v597, 0
        %vm599 = vcmp.lt.s32.totalorder %v597, 256
        %vm600 = vmand %vm598, %vm599
        %601 = vst.msk [vmem:[%s316] sm:$0x3] %vm600, %v595
        %s602 = sand.u32 %s202, 1
        %s603 = scalar_lea.sflag [#allocation5], %s602
        %s604 = sand.u32 %s202, 1
        %s605 = smul.addr %s604, 2
        %s606 = scalar_lea.vmem [#allocation6], %s605
        // Predicated region
        $region53: #{tpu_custom_call.1} parent=47 // pred_check
          %p607 = pneg %p212
        $region54: #{tpu_custom_call.1} parent=47 // pred_check_branch
          %609 = sbr.rel (%p607) target = $region56
        $region55: #{tpu_custom_call.1} parent=47 // pred_region
          %s610 = smul.u32 2, %s31
          %s612 = ssub.s32 32, 32
          %613 = vsyncadd %s603, %s612
          %s614 = smul.addr %s30, 2
          %s615 = sadd.s32 %s610, %s614
          %s616 = smul.addr %s615, 16
          %s617 = scalar_lea.hbm %s7, %s616
          %s619 = sshll.u32 %s606, 4
          %s620 = int_to_ptr.vmem [resolvable:$true] %s619
          %622 = dma.vmem_to_hbm [thread:$0]  %s620, 32, %s617, %s603
        $region56: #{tpu_custom_call.1} parent=47 // pred_fallthru
          _
      $region48: #{tpu_custom_call.1} parent=5 // pred_fallthru
        _
      %p623 = scmp.le.s32.totalorder 2, %s21
      // Predicated region
      $region57: #{tpu_custom_call.1} parent=5 // pred_check
        %p624 = pneg %p623
      $region58: #{tpu_custom_call.1} parent=5 // pred_check_branch
        %626 = sbr.rel (%p624) target = $region60
      $region59: #{tpu_custom_call.1} parent=5 // pred_region
        %s627 = ssub.s32 %s21, 2
        // Predicated region
        $region61: #{tpu_custom_call.1} parent=59 // pred_check
          %p628 = pneg %p218
        $region62: #{tpu_custom_call.1} parent=59 // pred_check_branch
          %630 = sbr.rel (%p628) target = $region64
        $region63: #{tpu_custom_call.1} parent=59 // pred_region
          %s631 = sand.u32 %s203, 1
          %s632 = scalar_lea.sflag [#allocation5], %s631
          %s633 = sand.u32 %s203, 1
          %s634 = smul.addr %s633, 2
          %s635 = scalar_lea.vmem [#allocation6], %s634
          %636 = dma.done %s632, 32
        $region64: #{tpu_custom_call.1} parent=59 // pred_fallthru
          _
      $region60: #{tpu_custom_call.1} parent=5 // pred_fallthru
        _
    $region6: #{tpu_custom_call.1} parent=1 // loop_footer
      %s25 = sadd.s32 1, %s21
    $region7: #{tpu_custom_call.1} parent=1 // loop_footer_branch
      %20 = sbr.rel target = $region3
    $region8: #{tpu_custom_call.1} parent=1 // loop_exit
      _
    %637 = vsyncpa [#allocation4], 1
    %s638 = scalar_lea.sflag [#allocation4], 1
    %639 = vsyncpa %s638, 1
    %640 = vsyncpa [#allocation5], 1
    %s641 = scalar_lea.sflag [#allocation5], 1
    %642 = vsyncpa %s641, 1

</llo_original>
